<compile_context>
chip_gen: v5e
topology: v5e:2x2
jax: 0.10.0
libtpu: 0.0.40
codegen_flags: <defaults>
</compile_context>

<pallas_src>
import re
import numpy as np
import jax
import jax.numpy as jnp
from jax import lax
from jax.experimental import pallas as pl
from jax.experimental.pallas import tpu as pltpu

NUM_TIMESTEPS = 1000
BETA_START = 0.0001
BETA_END = 0.02

LANES = 128
_MiB = 1024 * 1024


# ----------------------------------------------------------------------------
# Diffusion schedule buffers (same math as the PyTorch __init__, float32)
# ----------------------------------------------------------------------------
def make_buffers():
    betas = np.linspace(BETA_START, BETA_END, NUM_TIMESTEPS)
    alphas = 1.0 - betas
    alphas_cumprod = np.cumprod(alphas, axis=0)
    return {
        "sqrt_alphas_cumprod": jnp.asarray(np.sqrt(alphas_cumprod), jnp.float32),
        "sqrt_one_minus_alphas_cumprod": jnp.asarray(
            np.sqrt(1.0 - alphas_cumprod), jnp.float32
        ),
    }


# ----------------------------------------------------------------------------
# Generation-aware budgets (v5e/v6e: 128 MiB VMEM; v7x: 64 MiB per TC)
# ----------------------------------------------------------------------------
def _tpu_generation():
    try:
        kind = jax.devices()[0].device_kind.lower()
    except Exception:
        kind = ""
    m = re.search(r"v(\d+)", kind)
    return int(m.group(1)) if m else 0


def _budgets():
    """Returns (generation, vmem_limit_bytes, per-input target block bytes)."""
    gen = _tpu_generation()
    if gen >= 7:
        vmem_limit, target_block = 40 * _MiB, 3 * _MiB + 512 * 1024
    elif gen >= 5:
        vmem_limit, target_block = 80 * _MiB, 7 * _MiB
    else:  # unknown / older chips: stay conservative
        vmem_limit, target_block = 24 * _MiB, 2 * _MiB
    try:
        vmem_cap = int(pltpu.get_tpu_info().vmem_capacity_bytes)
        vmem_limit = min(vmem_limit, max(8 * _MiB, (vmem_cap * 3) // 5))
    except Exception:
        pass
    # 2 inputs x 2 pipeline buffers per block must fit with headroom.
    hard_cap = max(_MiB, (vmem_limit - 8 * _MiB) // 4)
    return gen, vmem_limit, min(target_block, hard_cap)


def _pick_row_tile(num_rows, row_bytes, max_block_bytes):
    """Pick a sublane tile. Returns (tile_rows, padded_rows).

    tile_rows is a multiple of 8 unless it equals num_rows (full extent, always
    layout-legal).  padded_rows is num_rows rounded up to a tile multiple; if it
    differs from num_rows the caller must zero-pad (and mask reductions)."""
    max_rows = max(1, int(max_block_bytes) // int(row_bytes))
    if num_rows <= max_rows:
        return num_rows, num_rows                    # full extent fits the budget
    d = (max_rows // 8) * 8
    while d >= 8:
        if num_rows % d == 0:
            return d, num_rows                       # exact multiple-of-8 divisor
        d -= 8
    # No divisor fits: hard-cap the tile (never exceed the VMEM budget) and pad.
    tile = max(8, (max_rows // 8) * 8)
    padded = ((num_rows + tile - 1) // tile) * tile
    return tile, padded


# ----------------------------------------------------------------------------
# PRIMARY: fused q_sample + channel-mix denoise + tanh + partial MSE kernel
#   grid = (B, P, blocks_per_split); loss partials folded into an (ACC_ROWS,128)
#   VMEM accumulator, finalized on the last reduction step of each (b, p).
# ----------------------------------------------------------------------------
def _make_fused_kernel(C, St, CH, ACC_ROWS, blocks_per_split, valid_rows,
                       needs_mask, compute_dtype):
    n_chunks = St // CH

    def kernel(t_ref, bias_ref, sa_ref, sb_ref, w_ref, x_ref, n_ref,
               loss_ref, acc_ref):
        b = pl.program_id(0)
        p = pl.program_id(1)
        j = pl.program_id(2)

        # schedule gather (extract) — scalar side, SMEM; hoisted out of the loop
        tb = t_ref[b]
        ca = sa_ref[tb].astype(compute_dtype)      # sqrt_alphas_cumprod[t[b]]
        cb = sb_ref[tb].astype(compute_dtype)      # sqrt_1m_alphas_cumprod[t[b]]
        bias = bias_ref[b]                         # f32: 0.1*y[b]+0.05*cos(0.01*t[b])
        wv = [[w_ref[c, d].astype(compute_dtype) for d in range(C)]
              for c in range(C)]

        @pl.when(j == 0)
        def _init():
            acc_ref[...] = jnp.zeros_like(acc_ref)

        row0 = (p * blocks_per_split + j) * St     # global row offset of this block

        def process_chunk(off):
            # Sub-chunk stays in vregs: C x (CH,128) per array.
            xs = [x_ref[0, c, pl.ds(off, CH), :].astype(compute_dtype)
                  for c in range(C)]
            ns = [n_ref[0, c, pl.ds(off, CH), :].astype(compute_dtype)
                  for c in range(C)]
            # q_sample: scalar-broadcast FMA on the VPU (bf16 on v6e/v7x)
            xn = [ca * xs[c] + cb * ns[c] for c in range(C)]
            # "external" denoise net fused in: CxC channel mix as C broadcast-FMA
            # passes on the VPU (an MXU matmul would be <4% utilized at C=4);
            # tanh on the EUP in f32; squared error accumulated in f32.
            # TODO(synk): switch the mix to an MXU jnp.dot path if C grows to ~64+.
            sq = None
            for d in range(C):
                h = xn[0] * wv[0][d]
                for c in range(1, C):
                    h = h + xn[c] * wv[c][d]
                pred = jnp.tanh(h.astype(jnp.float32) + bias)
                diff = pred - ns[d].astype(jnp.float32)
                sq = diff * diff if sq is None else sq + diff * diff
            if needs_mask:
                rows = row0 + off + lax.broadcasted_iota(jnp.int32, (CH, LANES), 0)
                sq = jnp.where(rows < valid_rows, sq, 0.0)
            # fold to (ACC_ROWS,128): trades stores for VALU adds (v5e: 1 vst slot)
            folded = sq[0:ACC_ROWS]
            for k in range(1, CH // ACC_ROWS):
                folded = folded + sq[k * ACC_ROWS:(k + 1) * ACC_ROWS]
            acc_ref[...] += folded

        if n_chunks == 1:
            process_chunk(0)                       # static path (tiny images)
        else:
            def chunk_body(ci, carry):
                process_chunk(pl.multiple_of(ci * CH, CH))
                return carry
            lax.fori_loop(0, n_chunks, chunk_body, 0, unroll=(n_chunks <= 8))

        @pl.when(j == pl.num_programs(2) - 1)
        def _finalize():
            # sublane reduce only; cross-lane + cross-(b,p) sum is a trivial
            # (B*P*128-element) wrapper reduction.
            loss_ref[...] = jnp.sum(acc_ref[...], axis=0, keepdims=True)[None]

    return kernel


def p_losses_fused(buffers, w, x_start, y, t, noise, compute_dtype=None):
    gen, vmem_limit, target_block = _budgets()
    if compute_dtype is None:
        # v6e/v7x VPUs have bf16 ALUs -> bf16 q_sample + channel mix there;
        # f32 on v5e (no bf16 VALU) and on unknown chips.
        compute_dtype = jnp.bfloat16 if gen >= 6 else jnp.float32

    B, C, H, W = x_start.shape
    hw = H * W
    if hw % LANES != 0:
        # TODO(synk): pad + mask a ragged lane dim; common sizes are mult. of 128.
        raise ValueError("H*W must be a multiple of 128")
    S = hw // LANES
    itemsize = jnp.dtype(x_start.dtype).itemsize
    St, S_pad = _pick_row_tile(S, C * LANES * itemsize, target_block)
    needs_mask = S_pad != S

    x4 = x_start.reshape(B, C, S, LANES)
    n4 = noise.reshape(B, C, S, LANES)
    if needs_mask:
        pad = S_pad - S
        x4 = jnp.pad(x4, ((0, 0), (0, 0), (0, pad), (0, 0)))
        n4 = jnp.pad(n4, ((0, 0), (0, 0), (0, pad), (0, 0)))

    # Sub-chunk rows so intermediates stay in vregs instead of spilling to VMEM.
    if St % 8 == 0:
        CH = 32 if St % 32 == 0 else (16 if St % 16 == 0 else 8)
        ACC_ROWS = 8
    else:                      # tiny full-extent tile (< 8 rows)
        CH = St
        ACC_ROWS = St

    n_blocks = S_pad // St
    P = 2 if n_blocks % 2 == 0 else 1     # keep both v7x TensorCores busy
    bps = n_blocks // P

    # per-batch conditioning scalar precomputed once (B values) -> SMEM
    bias = 0.1 * y.astype(jnp.float32) + 0.05 * jnp.cos(0.01 * t.astype(jnp.float32))

    kernel = _make_fused_kernel(C, St, CH, ACC_ROWS, bps, S, needs_mask,
                                compute_dtype)

    lane_sums = pl.pallas_call(
        kernel,
        out_shape=jax.ShapeDtypeStruct((B * P, 1, LANES), jnp.float32),
        grid=(B, P, bps),
        in_specs=[
            pl.BlockSpec(memory_space=pltpu.MemorySpace.SMEM),   # t        (B,)
            pl.BlockSpec(memory_space=pltpu.MemorySpace.SMEM),   # bias     (B,)
            pl.BlockSpec(memory_space=pltpu.MemorySpace.SMEM),   # table a  (T,)
            pl.BlockSpec(memory_space=pltpu.MemorySpace.SMEM),   # table b  (T,)
            pl.BlockSpec(memory_space=pltpu.MemorySpace.SMEM),   # w        (C,C)
            pl.BlockSpec((1, C, St, LANES), lambda b, p, j: (b, 0, p * bps + j, 0)),
            pl.BlockSpec((1, C, St, LANES), lambda b, p, j: (b, 0, p * bps + j, 0)),
        ],
        out_specs=pl.BlockSpec((1, 1, LANES), lambda b, p, j: (b * P + p, 0, 0)),
        scratch_shapes=[pltpu.VMEM((ACC_ROWS, LANES), jnp.float32)],
        compiler_params=pltpu.CompilerParams(
            # Reduction axis (j) MUST stay innermost + "arbitrary" for the
            # scratch accumulator init/finalize to be correct.
            dimension_semantics=("parallel", "parallel", "arbitrary"),
            vmem_limit_bytes=vmem_limit,
        ),
    )(
        t,
        bias,
        buffers["sqrt_alphas_cumprod"],
        buffers["sqrt_one_minus_alphas_cumprod"],
        w,
        x4,
        n4,
    )
    return jnp.sum(lane_sums) / float(B * C * hw)


# ----------------------------------------------------------------------------
# FALLBACK path (denoise_fn stays an arbitrary external callable)
# ----------------------------------------------------------------------------
def _q_sample_kernel(t_ref, sa_ref, sb_ref, x_ref, n_ref, o_ref):
    b = pl.program_id(0)
    tb = t_ref[b]
    ca = sa_ref[tb]
    cb = sb_ref[tb]
    o_ref[...] = (ca * x_ref[...].astype(jnp.float32)
                  + cb * n_ref[...].astype(jnp.float32)).astype(o_ref.dtype)


def q_sample_pallas(buffers, t, x_start, noise, out_dtype=None):
    _gen, vmem_limit, target_block = _budgets()
    B, C, H, W = x_start.shape
    total = C * H * W
    if total % LANES != 0:
        raise ValueError("C*H*W must be a multiple of 128")
    if out_dtype is None:
        out_dtype = x_start.dtype        # bf16 storage stays bf16 (HBM saving)
    M = total // LANES
    itemsize = jnp.dtype(x_start.dtype).itemsize
    Mt, M_pad = _pick_row_tile(M, LANES * itemsize, target_block)

    x3 = x_start.reshape(B, M, LANES)    # lane/sublane-dense view
    n3 = noise.reshape(B, M, LANES)
    if M_pad != M:                       # zero-padded rows are sliced off below
        x3 = jnp.pad(x3, ((0, 0), (0, M_pad - M), (0, 0)))
        n3 = jnp.pad(n3, ((0, 0), (0, M_pad - M), (0, 0)))

    out = pl.pallas_call(
        _q_sample_kernel,
        out_shape=jax.ShapeDtypeStruct((B, M_pad, LANES), out_dtype),
        grid=(B, M_pad // Mt),
        in_specs=[
            pl.BlockSpec(memory_space=pltpu.MemorySpace.SMEM),   # t
            pl.BlockSpec(memory_space=pltpu.MemorySpace.SMEM),   # table a
            pl.BlockSpec(memory_space=pltpu.MemorySpace.SMEM),   # table b
            pl.BlockSpec((1, Mt, LANES), lambda b, j: (b, j, 0)),
            pl.BlockSpec((1, Mt, LANES), lambda b, j: (b, j, 0)),
        ],
        out_specs=pl.BlockSpec((1, Mt, LANES), lambda b, j: (b, j, 0)),
        compiler_params=pltpu.CompilerParams(
            dimension_semantics=("parallel", "parallel"),
            vmem_limit_bytes=vmem_limit,
        ),
    )(t, buffers["sqrt_alphas_cumprod"],
      buffers["sqrt_one_minus_alphas_cumprod"], x3, n3)
    if M_pad != M:
        out = out[:, :M, :]
    return out.reshape(B, C, H, W)


def _mse_kernel(p_ref, n_ref, o_ref):
    @pl.when(pl.program_id(1) == 0)
    def _init():
        o_ref[...] = jnp.zeros_like(o_ref)
    d = p_ref[...].astype(jnp.float32) - n_ref[...].astype(jnp.float32)
    o_ref[...] += jnp.sum(d * d, axis=0, keepdims=True)[None]   # sublane reduce


def mse_pallas(pred, noise):
    _gen, vmem_limit, target_block = _budgets()
    total = pred.size
    if total % LANES != 0:
        raise ValueError("total elements must be a multiple of 128")
    R = total // LANES
    itemsize = jnp.dtype(pred.dtype).itemsize
    Rt, R_pad = _pick_row_tile(R, LANES * itemsize, target_block)

    p2 = pred.reshape(R, LANES)
    n2 = noise.reshape(R, LANES)
    if R_pad != R:                        # zero-padding both arrays adds 0 to SSE
        p2 = jnp.pad(p2, ((0, R_pad - R), (0, 0)))
        n2 = jnp.pad(n2, ((0, R_pad - R), (0, 0)))

    n_blocks = R_pad // Rt
    P = 2 if n_blocks % 2 == 0 else 1     # 2-way split keeps both v7x TCs busy
    bps = n_blocks // P

    lane_sums = pl.pallas_call(
        _mse_kernel,
        out_shape=jax.ShapeDtypeStruct((P, 1, LANES), jnp.float32),
        grid=(P, bps),
        in_specs=[
            pl.BlockSpec((Rt, LANES), lambda p, i: (p * bps + i, 0)),
            pl.BlockSpec((Rt, LANES), lambda p, i: (p * bps + i, 0)),
        ],
        out_specs=pl.BlockSpec((1, 1, LANES), lambda p, i: (p, 0, 0)),
        compiler_params=pltpu.CompilerParams(
            dimension_semantics=("parallel", "arbitrary"),
            vmem_limit_bytes=vmem_limit,
        ),
    )(p2, n2)
    return jnp.sum(lane_sums) / float(total)


def p_losses_split(buffers, denoise_fn, x_start, y, t, noise):
    x_noisy = q_sample_pallas(buffers, t, x_start, noise)
    pred_noise = denoise_fn(x_noisy, y, t)
    return mse_pallas(pred_noise, noise)


# ----------------------------------------------------------------------------
# Synthetic deterministic "external" denoise network (not part of the module)
# ----------------------------------------------------------------------------
def make_denoise_weights(channels):
    w = np.eye(channels, dtype=np.float32) + 0.05 * np.arange(
        channels * channels, dtype=np.float32
    ).reshape(channels, channels) / (channels * channels)
    return jnp.asarray(w, jnp.float32)


def make_denoise_fn(w):
    def denoise_fn(x_noisy, y, t):
        temb = jnp.cos(t.astype(jnp.float32) * 0.01)
        h = jnp.einsum("bchw,cd->bdhw", x_noisy.astype(jnp.float32), w)
        return jnp.tanh(h + 0.1 * y[:, None, None, None]
                        + 0.05 * temb[:, None, None, None])
    return denoise_fn


# ----------------------------------------------------------------------------
# forward(): t ~ randint, noise ~ randn, loss = mse(denoise(q_sample), noise)
# ----------------------------------------------------------------------------
def gaussian_diffusion_forward(buffers, denoise_weights, x_start, y, key):
    B = x_start.shape[0]
    kt, kn = jax.random.split(key)
    t = jax.random.randint(kt, (B,), 0, NUM_TIMESTEPS, dtype=jnp.int32)
    noise = jax.random.normal(kn, x_start.shape, dtype=x_start.dtype)
    loss = p_losses_fused(buffers, denoise_weights, x_start, y, t, noise)
    return loss, t, noise


if __name__ == "__main__":
    B, C, H, W = 2, 4, 16, 16
    key = jax.random.PRNGKey(0)
    kx, ky, kfwd = jax.random.split(key, 3)

    # bf16 storage halves HBM traffic; kernels upcast in-register as needed.
    x_start = jax.random.normal(kx, (B, C, H, W), dtype=jnp.float32).astype(jnp.bfloat16)
    y = jax.random.normal(ky, (B,), dtype=jnp.float32)

    buffers = make_buffers()
    w = make_denoise_weights(C)
    denoise_fn = make_denoise_fn(w)

    # primary fused path
    loss_fused, t, noise = gaussian_diffusion_forward(buffers, w, x_start, y, kfwd)
    loss_fused = jax.block_until_ready(loss_fused)

    # fallback path with the external denoise_fn (same t / noise)
    loss_split = jax.block_until_ready(
        p_losses_split(buffers, denoise_fn, x_start, y, t, noise))

    # pure-JAX f32 reference computed from the same (bf16-stored) inputs
    x32 = x_start.astype(jnp.float32)
    n32 = noise.astype(jnp.float32)
    ca = buffers["sqrt_alphas_cumprod"][t].reshape(-1, 1, 1, 1)
    cb = buffers["sqrt_one_minus_alphas_cumprod"][t].reshape(-1, 1, 1, 1)
    x_noisy_ref = ca * x32 + cb * n32
    pred_ref = denoise_fn(x_noisy_ref, y, t)
    loss_ref = float(jnp.mean((pred_ref - n32) ** 2))

    gen, _, _ = _budgets()
    # bf16 channel mix on v6e/v7x moves the loss at the ~1e-2 relative level.
    fused_rtol = 2e-2 if gen >= 6 else 1e-4
    assert np.allclose(float(loss_fused), loss_ref, rtol=fused_rtol, atol=1e-3), (
        float(loss_fused), loss_ref)
    # fallback path stores x_noisy in bf16 -> bf16-rounding-level difference
    assert np.allclose(float(loss_split), loss_ref, rtol=2e-2, atol=1e-3), (
        float(loss_split), loss_ref)

    print("KERNEL_OK")
</pallas_src>

<mosaic_0001>
module attributes {stable_mosaic.version = 11 : i64} {
  func.func @kernel(%arg0: i32, %arg1: i32, %arg2: i32, %arg3: memref<2xi32, #tpu.memory_space<smem>>, %arg4: memref<2xf32, #tpu.memory_space<smem>>, %arg5: memref<1000xf32, #tpu.memory_space<smem>>, %arg6: memref<1000xf32, #tpu.memory_space<smem>>, %arg7: memref<4x4xf32, #tpu.memory_space<smem>>, %arg8: memref<1x4x2x128xbf16, #tpu.memory_space<vmem>>, %arg9: memref<1x4x2x128xbf16, #tpu.memory_space<vmem>>, %arg10: memref<1x1x128xf32, #tpu.memory_space<vmem>>, %arg11: memref<2x128xf32, #tpu.memory_space<vmem>>) attributes {dimension_semantics = [#tpu.dimension_semantics<parallel>, #tpu.dimension_semantics<parallel>, #tpu.dimension_semantics<arbitrary>], iteration_bounds = array<i64: 2, 1, 1>, scalar_prefetch = 0 : i64, scratch_operands = 1 : i64, tpu.core_type = #tpu.core_type<tc>, window_params = [{transform_indices = @transform_0, window_bounds = array<i64: 2>}, {transform_indices = @transform_1, window_bounds = array<i64: 2>}, {transform_indices = @transform_2, window_bounds = array<i64: 1000>}, {transform_indices = @transform_3, window_bounds = array<i64: 1000>}, {transform_indices = @transform_4, window_bounds = array<i64: 4, 4>}, {transform_indices = @transform_5, window_bounds = array<i64: 1, 4, 2, 128>}, {transform_indices = @transform_6, window_bounds = array<i64: 1, 4, 2, 128>}, {transform_indices = @transform_7, window_bounds = array<i64: 1, 1, 128>}]} {
    %0 = arith.index_cast %arg0 : i32 to index
    %1 = memref.load %arg3[%0] : memref<2xi32, #tpu.memory_space<smem>>
    %2 = arith.index_cast %1 : i32 to index
    %3 = memref.load %arg5[%2] : memref<1000xf32, #tpu.memory_space<smem>>
    %4 = arith.index_cast %1 : i32 to index
    %5 = memref.load %arg6[%4] : memref<1000xf32, #tpu.memory_space<smem>>
    %6 = arith.index_cast %arg0 : i32 to index
    %7 = memref.load %arg4[%6] : memref<2xf32, #tpu.memory_space<smem>>
    %c0 = arith.constant 0 : index
    %c0_0 = arith.constant 0 : index
    %8 = memref.load %arg7[%c0, %c0_0] : memref<4x4xf32, #tpu.memory_space<smem>>
    %c0_1 = arith.constant 0 : index
    %c1 = arith.constant 1 : index
    %9 = memref.load %arg7[%c0_1, %c1] : memref<4x4xf32, #tpu.memory_space<smem>>
    %c0_2 = arith.constant 0 : index
    %c2 = arith.constant 2 : index
    %10 = memref.load %arg7[%c0_2, %c2] : memref<4x4xf32, #tpu.memory_space<smem>>
    %c0_3 = arith.constant 0 : index
    %c3 = arith.constant 3 : index
    %11 = memref.load %arg7[%c0_3, %c3] : memref<4x4xf32, #tpu.memory_space<smem>>
    %c1_4 = arith.constant 1 : index
    %c0_5 = arith.constant 0 : index
    %12 = memref.load %arg7[%c1_4, %c0_5] : memref<4x4xf32, #tpu.memory_space<smem>>
    %c1_6 = arith.constant 1 : index
    %c1_7 = arith.constant 1 : index
    %13 = memref.load %arg7[%c1_6, %c1_7] : memref<4x4xf32, #tpu.memory_space<smem>>
    %c1_8 = arith.constant 1 : index
    %c2_9 = arith.constant 2 : index
    %14 = memref.load %arg7[%c1_8, %c2_9] : memref<4x4xf32, #tpu.memory_space<smem>>
    %c1_10 = arith.constant 1 : index
    %c3_11 = arith.constant 3 : index
    %15 = memref.load %arg7[%c1_10, %c3_11] : memref<4x4xf32, #tpu.memory_space<smem>>
    %c2_12 = arith.constant 2 : index
    %c0_13 = arith.constant 0 : index
    %16 = memref.load %arg7[%c2_12, %c0_13] : memref<4x4xf32, #tpu.memory_space<smem>>
    %c2_14 = arith.constant 2 : index
    %c1_15 = arith.constant 1 : index
    %17 = memref.load %arg7[%c2_14, %c1_15] : memref<4x4xf32, #tpu.memory_space<smem>>
    %c2_16 = arith.constant 2 : index
    %c2_17 = arith.constant 2 : index
    %18 = memref.load %arg7[%c2_16, %c2_17] : memref<4x4xf32, #tpu.memory_space<smem>>
    %c2_18 = arith.constant 2 : index
    %c3_19 = arith.constant 3 : index
    %19 = memref.load %arg7[%c2_18, %c3_19] : memref<4x4xf32, #tpu.memory_space<smem>>
    %c3_20 = arith.constant 3 : index
    %c0_21 = arith.constant 0 : index
    %20 = memref.load %arg7[%c3_20, %c0_21] : memref<4x4xf32, #tpu.memory_space<smem>>
    %c3_22 = arith.constant 3 : index
    %c1_23 = arith.constant 1 : index
    %21 = memref.load %arg7[%c3_22, %c1_23] : memref<4x4xf32, #tpu.memory_space<smem>>
    %c3_24 = arith.constant 3 : index
    %c2_25 = arith.constant 2 : index
    %22 = memref.load %arg7[%c3_24, %c2_25] : memref<4x4xf32, #tpu.memory_space<smem>>
    %c3_26 = arith.constant 3 : index
    %c3_27 = arith.constant 3 : index
    %23 = memref.load %arg7[%c3_26, %c3_27] : memref<4x4xf32, #tpu.memory_space<smem>>
    %c0_i32 = arith.constant 0 : i32
    %24 = arith.cmpi eq, %arg2, %c0_i32 : i32
    %25 = arith.extui %24 : i1 to i32
    %c0_i32_28 = arith.constant 0 : i32
    %26 = arith.cmpi ne, %25, %c0_i32_28 : i32
    scf.if %26 {
      %cst = arith.constant 0.000000e+00 : f32
      %144 = vector.broadcast %cst : f32 to vector<2x128xf32>
      %c0_67 = arith.constant 0 : index
      %c0_68 = arith.constant 0 : index
      %145 = vector.load %arg11[%c0_67, %c0_68] : memref<2x128xf32, #tpu.memory_space<vmem>>, vector<2x128xf32>
      tpu.vector_store %arg11[%c0_67, %c0_68], %144 {strides = array<i32>} : memref<2x128xf32, #tpu.memory_space<vmem>>, vector<2x128xf32>,
    } else {
    }
    %c0_29 = arith.constant 0 : index
    %c0_30 = arith.constant 0 : index
    %c0_31 = arith.constant 0 : index
    %c0_32 = arith.constant 0 : index
    %27 = vector.load %arg8[%c0_29, %c0_30, %c0_31, %c0_32] : memref<1x4x2x128xbf16, #tpu.memory_space<vmem>>, vector<1x1x2x128xbf16>
    %28 = vector.shape_cast %27 : vector<1x1x2x128xbf16> to vector<2x128xbf16>
    %29 = arith.extf %28 : vector<2x128xbf16> to vector<2x128xf32>
    %c0_33 = arith.constant 0 : index
    %c1_34 = arith.constant 1 : index
    %c0_35 = arith.constant 0 : index
    %c0_36 = arith.constant 0 : index
    %30 = vector.load %arg8[%c0_33, %c1_34, %c0_35, %c0_36] : memref<1x4x2x128xbf16, #tpu.memory_space<vmem>>, vector<1x1x2x128xbf16>
    %31 = vector.shape_cast %30 : vector<1x1x2x128xbf16> to vector<2x128xbf16>
    %32 = arith.extf %31 : vector<2x128xbf16> to vector<2x128xf32>
    %c0_37 = arith.constant 0 : index
    %c2_38 = arith.constant 2 : index
    %c0_39 = arith.constant 0 : index
    %c0_40 = arith.constant 0 : index
    %33 = vector.load %arg8[%c0_37, %c2_38, %c0_39, %c0_40] : memref<1x4x2x128xbf16, #tpu.memory_space<vmem>>, vector<1x1x2x128xbf16>
    %34 = vector.shape_cast %33 : vector<1x1x2x128xbf16> to vector<2x128xbf16>
    %35 = arith.extf %34 : vector<2x128xbf16> to vector<2x128xf32>
    %c0_41 = arith.constant 0 : index
    %c3_42 = arith.constant 3 : index
    %c0_43 = arith.constant 0 : index
    %c0_44 = arith.constant 0 : index
    %36 = vector.load %arg8[%c0_41, %c3_42, %c0_43, %c0_44] : memref<1x4x2x128xbf16, #tpu.memory_space<vmem>>, vector<1x1x2x128xbf16>
    %37 = vector.shape_cast %36 : vector<1x1x2x128xbf16> to vector<2x128xbf16>
    %38 = arith.extf %37 : vector<2x128xbf16> to vector<2x128xf32>
    %c0_45 = arith.constant 0 : index
    %c0_46 = arith.constant 0 : index
    %c0_47 = arith.constant 0 : index
    %c0_48 = arith.constant 0 : index
    %39 = vector.load %arg9[%c0_45, %c0_46, %c0_47, %c0_48] : memref<1x4x2x128xbf16, #tpu.memory_space<vmem>>, vector<1x1x2x128xbf16>
    %40 = vector.shape_cast %39 : vector<1x1x2x128xbf16> to vector<2x128xbf16>
    %41 = arith.extf %40 : vector<2x128xbf16> to vector<2x128xf32>
    %c0_49 = arith.constant 0 : index
    %c1_50 = arith.constant 1 : index
    %c0_51 = arith.constant 0 : index
    %c0_52 = arith.constant 0 : index
    %42 = vector.load %arg9[%c0_49, %c1_50, %c0_51, %c0_52] : memref<1x4x2x128xbf16, #tpu.memory_space<vmem>>, vector<1x1x2x128xbf16>
    %43 = vector.shape_cast %42 : vector<1x1x2x128xbf16> to vector<2x128xbf16>
    %44 = arith.extf %43 : vector<2x128xbf16> to vector<2x128xf32>
    %c0_53 = arith.constant 0 : index
    %c2_54 = arith.constant 2 : index
    %c0_55 = arith.constant 0 : index
    %c0_56 = arith.constant 0 : index
    %45 = vector.load %arg9[%c0_53, %c2_54, %c0_55, %c0_56] : memref<1x4x2x128xbf16, #tpu.memory_space<vmem>>, vector<1x1x2x128xbf16>
    %46 = vector.shape_cast %45 : vector<1x1x2x128xbf16> to vector<2x128xbf16>
    %47 = arith.extf %46 : vector<2x128xbf16> to vector<2x128xf32>
    %c0_57 = arith.constant 0 : index
    %c3_58 = arith.constant 3 : index
    %c0_59 = arith.constant 0 : index
    %c0_60 = arith.constant 0 : index
    %48 = vector.load %arg9[%c0_57, %c3_58, %c0_59, %c0_60] : memref<1x4x2x128xbf16, #tpu.memory_space<vmem>>, vector<1x1x2x128xbf16>
    %49 = vector.shape_cast %48 : vector<1x1x2x128xbf16> to vector<2x128xbf16>
    %50 = arith.extf %49 : vector<2x128xbf16> to vector<2x128xf32>
    %51 = vector.broadcast %3 : f32 to vector<2x128xf32>
    %52 = arith.mulf %51, %29 : vector<2x128xf32>
    %53 = vector.broadcast %5 : f32 to vector<2x128xf32>
    %54 = arith.mulf %53, %41 : vector<2x128xf32>
    %55 = arith.addf %52, %54 : vector<2x128xf32>
    %56 = vector.broadcast %3 : f32 to vector<2x128xf32>
    %57 = arith.mulf %56, %32 : vector<2x128xf32>
    %58 = vector.broadcast %5 : f32 to vector<2x128xf32>
    %59 = arith.mulf %58, %44 : vector<2x128xf32>
    %60 = arith.addf %57, %59 : vector<2x128xf32>
    %61 = vector.broadcast %3 : f32 to vector<2x128xf32>
    %62 = arith.mulf %61, %35 : vector<2x128xf32>
    %63 = vector.broadcast %5 : f32 to vector<2x128xf32>
    %64 = arith.mulf %63, %47 : vector<2x128xf32>
    %65 = arith.addf %62, %64 : vector<2x128xf32>
    %66 = vector.broadcast %3 : f32 to vector<2x128xf32>
    %67 = arith.mulf %66, %38 : vector<2x128xf32>
    %68 = vector.broadcast %5 : f32 to vector<2x128xf32>
    %69 = arith.mulf %68, %50 : vector<2x128xf32>
    %70 = arith.addf %67, %69 : vector<2x128xf32>
    %71 = vector.broadcast %8 : f32 to vector<2x128xf32>
    %72 = arith.mulf %55, %71 : vector<2x128xf32>
    %73 = vector.broadcast %12 : f32 to vector<2x128xf32>
    %74 = arith.mulf %60, %73 : vector<2x128xf32>
    %75 = arith.addf %72, %74 : vector<2x128xf32>
    %76 = vector.broadcast %16 : f32 to vector<2x128xf32>
    %77 = arith.mulf %65, %76 : vector<2x128xf32>
    %78 = arith.addf %75, %77 : vector<2x128xf32>
    %79 = vector.broadcast %20 : f32 to vector<2x128xf32>
    %80 = arith.mulf %70, %79 : vector<2x128xf32>
    %81 = arith.addf %78, %80 : vector<2x128xf32>
    %82 = vector.broadcast %7 : f32 to vector<2x128xf32>
    %83 = arith.addf %81, %82 : vector<2x128xf32>
    %84 = math.tanh %83 : vector<2x128xf32>
    %85 = arith.subf %84, %41 : vector<2x128xf32>
    %86 = arith.mulf %85, %85 : vector<2x128xf32>
    %87 = vector.broadcast %9 : f32 to vector<2x128xf32>
    %88 = arith.mulf %55, %87 : vector<2x128xf32>
    %89 = vector.broadcast %13 : f32 to vector<2x128xf32>
    %90 = arith.mulf %60, %89 : vector<2x128xf32>
    %91 = arith.addf %88, %90 : vector<2x128xf32>
    %92 = vector.broadcast %17 : f32 to vector<2x128xf32>
    %93 = arith.mulf %65, %92 : vector<2x128xf32>
    %94 = arith.addf %91, %93 : vector<2x128xf32>
    %95 = vector.broadcast %21 : f32 to vector<2x128xf32>
    %96 = arith.mulf %70, %95 : vector<2x128xf32>
    %97 = arith.addf %94, %96 : vector<2x128xf32>
    %98 = vector.broadcast %7 : f32 to vector<2x128xf32>
    %99 = arith.addf %97, %98 : vector<2x128xf32>
    %100 = math.tanh %99 : vector<2x128xf32>
    %101 = arith.subf %100, %44 : vector<2x128xf32>
    %102 = arith.mulf %101, %101 : vector<2x128xf32>
    %103 = arith.addf %86, %102 : vector<2x128xf32>
    %104 = vector.broadcast %10 : f32 to vector<2x128xf32>
    %105 = arith.mulf %55, %104 : vector<2x128xf32>
    %106 = vector.broadcast %14 : f32 to vector<2x128xf32>
    %107 = arith.mulf %60, %106 : vector<2x128xf32>
    %108 = arith.addf %105, %107 : vector<2x128xf32>
    %109 = vector.broadcast %18 : f32 to vector<2x128xf32>
    %110 = arith.mulf %65, %109 : vector<2x128xf32>
    %111 = arith.addf %108, %110 : vector<2x128xf32>
    %112 = vector.broadcast %22 : f32 to vector<2x128xf32>
    %113 = arith.mulf %70, %112 : vector<2x128xf32>
    %114 = arith.addf %111, %113 : vector<2x128xf32>
    %115 = vector.broadcast %7 : f32 to vector<2x128xf32>
    %116 = arith.addf %114, %115 : vector<2x128xf32>
    %117 = math.tanh %116 : vector<2x128xf32>
    %118 = arith.subf %117, %47 : vector<2x128xf32>
    %119 = arith.mulf %118, %118 : vector<2x128xf32>
    %120 = arith.addf %103, %119 : vector<2x128xf32>
    %121 = vector.broadcast %11 : f32 to vector<2x128xf32>
    %122 = arith.mulf %55, %121 : vector<2x128xf32>
    %123 = vector.broadcast %15 : f32 to vector<2x128xf32>
    %124 = arith.mulf %60, %123 : vector<2x128xf32>
    %125 = arith.addf %122, %124 : vector<2x128xf32>
    %126 = vector.broadcast %19 : f32 to vector<2x128xf32>
    %127 = arith.mulf %65, %126 : vector<2x128xf32>
    %128 = arith.addf %125, %127 : vector<2x128xf32>
    %129 = vector.broadcast %23 : f32 to vector<2x128xf32>
    %130 = arith.mulf %70, %129 : vector<2x128xf32>
    %131 = arith.addf %128, %130 : vector<2x128xf32>
    %132 = vector.broadcast %7 : f32 to vector<2x128xf32>
    %133 = arith.addf %131, %132 : vector<2x128xf32>
    %134 = math.tanh %133 : vector<2x128xf32>
    %135 = arith.subf %134, %50 : vector<2x128xf32>
    %136 = arith.mulf %135, %135 : vector<2x128xf32>
    %137 = arith.addf %120, %136 : vector<2x128xf32>
    %c0_61 = arith.constant 0 : index
    %c0_62 = arith.constant 0 : index
    %138 = vector.load %arg11[%c0_61, %c0_62] : memref<2x128xf32, #tpu.memory_space<vmem>>, vector<2x128xf32>
    %139 = arith.addf %138, %137 : vector<2x128xf32>
    %c0_63 = arith.constant 0 : index
    %c0_64 = arith.constant 0 : index
    %140 = vector.load %arg11[%c0_63, %c0_64] : memref<2x128xf32, #tpu.memory_space<vmem>>, vector<2x128xf32>
    tpu.vector_store %arg11[%c0_63, %c0_64], %139 {strides = array<i32>} : memref<2x128xf32, #tpu.memory_space<vmem>>, vector<2x128xf32>,
    %c0_i32_65 = arith.constant 0 : i32
    %141 = arith.cmpi eq, %arg2, %c0_i32_65 : i32
    %142 = arith.extui %141 : i1 to i32
    %c0_i32_66 = arith.constant 0 : i32
    %143 = arith.cmpi ne, %142, %c0_i32_66 : i32
    scf.if %143 {
      %c0_67 = arith.constant 0 : index
      %c0_68 = arith.constant 0 : index
      %144 = vector.load %arg11[%c0_67, %c0_68] : memref<2x128xf32, #tpu.memory_space<vmem>>, vector<2x128xf32>
      %cst = arith.constant dense<0.000000e+00> : vector<128xf32>
      %145 = vector.multi_reduction <add>, %144, %cst [0] : vector<2x128xf32> to vector<128xf32>
      %146 = vector.shape_cast %145 : vector<128xf32> to vector<1x128xf32>
      %147 = vector.shape_cast %146 : vector<1x128xf32> to vector<1x1x128xf32>
      %c0_69 = arith.constant 0 : index
      %c0_70 = arith.constant 0 : index
      %c0_71 = arith.constant 0 : index
      %148 = vector.load %arg10[%c0_69, %c0_70, %c0_71] : memref<1x1x128xf32, #tpu.memory_space<vmem>>, vector<1x1x128xf32>
      tpu.vector_store %arg10[%c0_69, %c0_70, %c0_71], %147 {strides = array<i32>} : memref<1x1x128xf32, #tpu.memory_space<vmem>>, vector<1x1x128xf32>,
    } else {
    }
    return
  }
  func.func @transform_0(%arg0: i32, %arg1: i32, %arg2: i32) -> i32 {
    %c0_i32 = arith.constant 0 : i32
    %c0_i32_0 = arith.constant 0 : i32
    return %c0_i32 : i32
  }
  func.func @transform_1(%arg0: i32, %arg1: i32, %arg2: i32) -> i32 {
    %c0_i32 = arith.constant 0 : i32
    %c0_i32_0 = arith.constant 0 : i32
    return %c0_i32 : i32
  }
  func.func @transform_2(%arg0: i32, %arg1: i32, %arg2: i32) -> i32 {
    %c0_i32 = arith.constant 0 : i32
    %c0_i32_0 = arith.constant 0 : i32
    return %c0_i32 : i32
  }
  func.func @transform_3(%arg0: i32, %arg1: i32, %arg2: i32) -> i32 {
    %c0_i32 = arith.constant 0 : i32
    %c0_i32_0 = arith.constant 0 : i32
    return %c0_i32 : i32
  }
  func.func @transform_4(%arg0: i32, %arg1: i32, %arg2: i32) -> (i32, i32) {
    %c0_i32 = arith.constant 0 : i32
    %c0_i32_0 = arith.constant 0 : i32
    %c0_i32_1 = arith.constant 0 : i32
    return %c0_i32, %c0_i32_0 : i32, i32
  }
  func.func @transform_5(%arg0: i32, %arg1: i32, %arg2: i32) -> (i32, i32, i32, i32) {
    %c1_i32 = arith.constant 1 : i32
    %0 = arith.muli %arg1, %c1_i32 : i32
    %1 = arith.addi %0, %arg2 : i32
    %c0_i32 = arith.constant 0 : i32
    %c0_i32_0 = arith.constant 0 : i32
    %c0_i32_1 = arith.constant 0 : i32
    return %arg0, %c0_i32, %1, %c0_i32_0 : i32, i32, i32, i32
  }
  func.func @transform_6(%arg0: i32, %arg1: i32, %arg2: i32) -> (i32, i32, i32, i32) {
    %c1_i32 = arith.constant 1 : i32
    %0 = arith.muli %arg1, %c1_i32 : i32
    %1 = arith.addi %0, %arg2 : i32
    %c0_i32 = arith.constant 0 : i32
    %c0_i32_0 = arith.constant 0 : i32
    %c0_i32_1 = arith.constant 0 : i32
    return %arg0, %c0_i32, %1, %c0_i32_0 : i32, i32, i32, i32
  }
  func.func @transform_7(%arg0: i32, %arg1: i32, %arg2: i32) -> (i32, i32, i32) {
    %c1_i32 = arith.constant 1 : i32
    %0 = arith.muli %arg0, %c1_i32 : i32
    %1 = arith.addi %0, %arg1 : i32
    %c0_i32 = arith.constant 0 : i32
    %c0_i32_0 = arith.constant 0 : i32
    %c0_i32_1 = arith.constant 0 : i32
    return %1, %c0_i32, %c0_i32_0 : i32, i32, i32
  }
}

</mosaic_0001>

<llo_original>
// kernel: tpu_custom_call.1
$region0: #{tpu_custom_call.1}
  #allocation0 [shape = 'u32[]', space=smem, size = 0x4, offset = 0x4, fixed_abs, tag = 'smem constant byte address 0x4 - core index']
  #allocation1 [shape = 'u32[72,128]{1,0:T(1,128)}', space=vmem, size = 0x9000, scoped, tag = 'internal scratch']
  #allocation2 [shape = 'f32[2,128]{1,0:T(2,128)}', space=vmem, size = 0x400, scoped, tag = 'scratch operand']
  %s0 = inlined_call_operand.hbm [shape: s32[2], index: 0, kind: input, shape index: {}]
  %s1 = inlined_call_operand.hbm [shape: f32[2], index: 1, kind: input, shape index: {}]
  %s2 = inlined_call_operand.hbm [shape: f32[1000], index: 2, kind: input, shape index: {}]
  %s3 = inlined_call_operand.hbm [shape: f32[1000], index: 3, kind: input, shape index: {}]
  %s4 = inlined_call_operand.hbm [shape: f32[4,4], index: 4, kind: input, shape index: {}]
  %s5 = inlined_call_operand.hbm [shape: bf16[2,4,2,128], index: 5, kind: input, shape index: {}]
  %s6 = inlined_call_operand.hbm [shape: bf16[2,4,2,128], index: 6, kind: input, shape index: {}]
  %s7 = inlined_call_operand.hbm [shape: f32[2,1,128], index: 7, kind: output, shape index: {}]
  %s8 = sld [smem:[#allocation0]]
  $region97: #{tpu_custom_call.1} parent=0
    _
  %s10 = ssub.s32 1, %s8
  %s11 = scalar_select 0, %s10, %s8
  $region1: #{tpu_custom_call.1} parent=0
    #allocation3 [shape = 'u8[512]{0}', space=smem, size = 0x200, scoped, tag = 'input window, operand 0, single buffered']
    #allocation4 [shape = 's32[2]{0}', space=sflag, size = 0x8, scoped, tag = 'scoped memory for tpu_custom_call.1']
    #allocation5 [shape = 's32[2]{0}', space=sflag, size = 0x8, scoped, tag = 'scoped memory for tpu_custom_call.1']
    #allocation6 [shape = 's32[2]{0}', space=sflag, size = 0x8, scoped, tag = 'scoped memory for tpu_custom_call.1']
    #allocation7 [shape = 'u8[512]{0}', space=smem, size = 0x200, scoped, tag = 'input window, operand 1, single buffered']
    #allocation8 [shape = 's32[1]{0}', space=sflag, size = 0x4, scoped, tag = 'scoped memory for tpu_custom_call.1']
    #allocation9 [shape = 'u8[4096]{0}', space=smem, size = 0x1000, scoped, tag = 'input window, operand 2, single buffered']
    #allocation10 [shape = 'u8[4096]{0}', space=smem, size = 0x1000, scoped, tag = 'input window, operand 3, single buffered']
    #allocation11 [shape = 's32[1]{0}', space=sflag, size = 0x4, scoped, tag = 'scoped memory for tpu_custom_call.1']
    #allocation12 [shape = 'u8[2048]{0}', space=smem, size = 0x800, scoped, tag = 'input window, operand 4, single buffered']
    #allocation13 [shape = 'u8[4096]{0}', space=vmem, size = 0x1000, scoped, tag = 'input window, operand 5']
    #allocation14 [shape = 'u8[4096]{0}', space=vmem, size = 0x1000, scoped, tag = 'input window, operand 6']
    #allocation15 [shape = 's32[2]{0}', space=sflag, size = 0x8, scoped, tag = 'scoped memory for tpu_custom_call.1']
    #allocation16 [shape = 'u8[1024]{0}', space=vmem, size = 0x400, scoped, tag = 'output window, operand 0']
    %12 = vsyncpa [#allocation6], 0
    %13 = vsyncpa [#allocation8], 0
    %14 = vsyncpa [#allocation11], 0
    %15 = vsyncpa [#allocation4], 0
    %s16 = scalar_lea.sflag [#allocation4], 1
    %17 = vsyncpa %s16, 0
    %18 = vsyncpa [#allocation15], 0
    %s19 = scalar_lea.sflag [#allocation15], 1
    %20 = vsyncpa %s19, 0
    %21 = vsyncpa [#allocation5], 0
    %s22 = scalar_lea.sflag [#allocation5], 1
    %23 = vsyncpa %s22, 0
    loop: start=0, step=1, limit=4
    $region2: #{tpu_custom_call.1} parent=1 // loop_pre_header
      _
    $region3: #{tpu_custom_call.1} parent=1 // loop_header
      %s25 = sphi 0, %s29
      %p26 = scmp.ge.s32.totalorder %s25, 4
      %s32 = sphi 0, %s51
      %s33 = sphi 0, %s47
      %s34 = sphi 0, %s43
      %s35 = sphi 0, %s32
      %s36 = sphi 0, %s33
      %s37 = sphi 0, %s34
      %s38 = sphi 0, %s35
      %s39 = sphi 0, %s36
      %s40 = sphi 0, %s37
      %s52 = sphi 0, %s52
      %s54 = sphi 0, %s52
      %s55 = sphi 0, %s54
      %s69 = sphi 0, %s55
      %s73 = sphi 0, %s73
      %s75 = sphi 0, %s73
      %s76 = sphi 0, %s75
      %s90 = sphi 0, %s76
      %s94 = sphi 0, %s94
      %s96 = sphi 0, %s94
      %s97 = sphi 0, %s96
      %s111 = sphi 0, %s97
      %s115 = sphi 0, %s115
      %s117 = sphi 0, %s115
      %s118 = sphi 0, %s117
      %s132 = sphi 0, %s118
      %s136 = sphi 0, %s136
      %s138 = sphi 0, %s136
      %s139 = sphi 0, %s138
      %s153 = sphi 0, %s139
      %s163 = sphi 0, %s165
      %s166 = sphi 0, %s163
      %s167 = sphi 0, %s166
      %s183 = sphi 0, %s167
      %s193 = sphi 0, %s195
      %s196 = sphi 0, %s193
      %s197 = sphi 0, %s196
      %s213 = sphi 0, %s197
      %s221 = sphi 0, %s223
      %s224 = sphi 0, %s221
      %s225 = sphi 0, %s224
      %s241 = sphi 0, %s225
    $region4: #{tpu_custom_call.1} parent=1 // loop_header_branch
      %28 = sbr.rel (%p26) target = $region8
    $region5: #{tpu_custom_call.1} parent=1 // loop_body
      %s30 = ssub.s32 %s25, 1
      %s31 = ssub.s32 %s25, 2
      %s41 = sadd.s32 1, %s34
      %p42 = scmp.ge.s32.totalorder %s41, 1
      %s43 = scalar_select %p42, 0, %s41
      %s44 = sadd.s32 1, %s33
      %s45 = scalar_select %p42, %s44, %s33
      %p46 = scmp.ge.s32.totalorder %s45, 1
      %s47 = scalar_select %p46, 0, %s45
      %s48 = sadd.s32 1, %s32
      %s49 = scalar_select %p46, %s48, %s32
      %p50 = scmp.ge.s32.totalorder %s49, 2
      %s51 = scalar_select %p50, 0, %s49
      %s53 = sadd.s32 %s52, 1
      %p56 = scmp.eq.s32.totalorder %s25, 1
      %p57 = scmp.ne.s32.totalorder %s52, %s54
      %p58 = scmp.eq.s32.totalorder %s25, 0
      %p59 = por %p57, %p58
      %p60 = scmp.ne.s32.totalorder %s52, %s54
      %p61 = scmp.eq.s32.totalorder %s30, 1
      %p62 = por %p60, %p61
      %p63 = scmp.ne.s32.totalorder %s54, %s55
      %p64 = scmp.eq.s32.totalorder %s30, 0
      %p65 = por %p63, %p64
      %p66 = scmp.ne.s32.totalorder %s54, %s55
      %p67 = scmp.eq.s32.totalorder %s31, 1
      %p68 = por %p66, %p67
      %p70 = scmp.ne.s32.totalorder %s55, %s69
      %p71 = scmp.eq.s32.totalorder %s31, 0
      %p72 = por %p70, %p71
      %s74 = sadd.s32 %s73, 1
      %p77 = scmp.eq.s32.totalorder %s25, 1
      %p78 = scmp.ne.s32.totalorder %s73, %s75
      %p79 = scmp.eq.s32.totalorder %s25, 0
      %p80 = por %p78, %p79
      %p81 = scmp.ne.s32.totalorder %s73, %s75
      %p82 = scmp.eq.s32.totalorder %s30, 1
      %p83 = por %p81, %p82
      %p84 = scmp.ne.s32.totalorder %s75, %s76
      %p85 = scmp.eq.s32.totalorder %s30, 0
      %p86 = por %p84, %p85
      %p87 = scmp.ne.s32.totalorder %s75, %s76
      %p88 = scmp.eq.s32.totalorder %s31, 1
      %p89 = por %p87, %p88
      %p91 = scmp.ne.s32.totalorder %s76, %s90
      %p92 = scmp.eq.s32.totalorder %s31, 0
      %p93 = por %p91, %p92
      %s95 = sadd.s32 %s94, 1
      %p98 = scmp.eq.s32.totalorder %s25, 1
      %p99 = scmp.ne.s32.totalorder %s94, %s96
      %p100 = scmp.eq.s32.totalorder %s25, 0
      %p101 = por %p99, %p100
      %p102 = scmp.ne.s32.totalorder %s94, %s96
      %p103 = scmp.eq.s32.totalorder %s30, 1
      %p104 = por %p102, %p103
      %p105 = scmp.ne.s32.totalorder %s96, %s97
      %p106 = scmp.eq.s32.totalorder %s30, 0
      %p107 = por %p105, %p106
      %p108 = scmp.ne.s32.totalorder %s96, %s97
      %p109 = scmp.eq.s32.totalorder %s31, 1
      %p110 = por %p108, %p109
      %p112 = scmp.ne.s32.totalorder %s97, %s111
      %p113 = scmp.eq.s32.totalorder %s31, 0
      %p114 = por %p112, %p113
      %s116 = sadd.s32 %s115, 1
      %p119 = scmp.eq.s32.totalorder %s25, 1
      %p120 = scmp.ne.s32.totalorder %s115, %s117
      %p121 = scmp.eq.s32.totalorder %s25, 0
      %p122 = por %p120, %p121
      %p123 = scmp.ne.s32.totalorder %s115, %s117
      %p124 = scmp.eq.s32.totalorder %s30, 1
      %p125 = por %p123, %p124
      %p126 = scmp.ne.s32.totalorder %s117, %s118
      %p127 = scmp.eq.s32.totalorder %s30, 0
      %p128 = por %p126, %p127
      %p129 = scmp.ne.s32.totalorder %s117, %s118
      %p130 = scmp.eq.s32.totalorder %s31, 1
      %p131 = por %p129, %p130
      %p133 = scmp.ne.s32.totalorder %s118, %s132
      %p134 = scmp.eq.s32.totalorder %s31, 0
      %p135 = por %p133, %p134
      %s137 = sadd.s32 %s136, 1
      %p140 = scmp.eq.s32.totalorder %s25, 1
      %p141 = scmp.ne.s32.totalorder %s136, %s138
      %p142 = scmp.eq.s32.totalorder %s25, 0
      %p143 = por %p141, %p142
      %p144 = scmp.ne.s32.totalorder %s136, %s138
      %p145 = scmp.eq.s32.totalorder %s30, 1
      %p146 = por %p144, %p145
      %p147 = scmp.ne.s32.totalorder %s138, %s139
      %p148 = scmp.eq.s32.totalorder %s30, 0
      %p149 = por %p147, %p148
      %p150 = scmp.ne.s32.totalorder %s138, %s139
      %p151 = scmp.eq.s32.totalorder %s31, 1
      %p152 = por %p150, %p151
      %p154 = scmp.ne.s32.totalorder %s139, %s153
      %p155 = scmp.eq.s32.totalorder %s31, 0
      %p156 = por %p154, %p155
      %s157 = sadd.s32 %s33, %s34
      %s158 = sadd.s32 %s47, %s43
      %s159 = ssub.s32 %s32, %s51
      %s160 = ssub.s32 %s157, %s158
      %s161 = sor.u32 %s159, %s160
      %p162 = scmp.eq.s32.totalorder %s161, 0
      %s164 = sadd.s32 %s163, 1
      %s165 = scalar_select %p162, %s163, %s164
      %p168 = pneg %p162
      %p169 = scmp.eq.s32.totalorder %s25, 1
      %p170 = por %p168, %p169
      %p171 = scmp.ne.s32.totalorder %s163, %s166
      %p172 = scmp.eq.s32.totalorder %s25, 0
      %p173 = por %p171, %p172
      %p174 = scmp.ne.s32.totalorder %s163, %s166
      %p175 = scmp.eq.s32.totalorder %s30, 1
      %p176 = por %p174, %p175
      %p177 = scmp.ne.s32.totalorder %s166, %s167
      %p178 = scmp.eq.s32.totalorder %s30, 0
      %p179 = por %p177, %p178
      %p180 = scmp.ne.s32.totalorder %s166, %s167
      %p181 = scmp.eq.s32.totalorder %s31, 1
      %p182 = por %p180, %p181
      %p184 = scmp.ne.s32.totalorder %s167, %s183
      %p185 = scmp.eq.s32.totalorder %s31, 0
      %p186 = por %p184, %p185
      %s187 = sadd.s32 %s33, %s34
      %s188 = sadd.s32 %s47, %s43
      %s189 = ssub.s32 %s32, %s51
      %s190 = ssub.s32 %s187, %s188
      %s191 = sor.u32 %s189, %s190
      %p192 = scmp.eq.s32.totalorder %s191, 0
      %s194 = sadd.s32 %s193, 1
      %s195 = scalar_select %p192, %s193, %s194
      %p198 = pneg %p192
      %p199 = scmp.eq.s32.totalorder %s25, 1
      %p200 = por %p198, %p199
      %p201 = scmp.ne.s32.totalorder %s193, %s196
      %p202 = scmp.eq.s32.totalorder %s25, 0
      %p203 = por %p201, %p202
      %p204 = scmp.ne.s32.totalorder %s193, %s196
      %p205 = scmp.eq.s32.totalorder %s30, 1
      %p206 = por %p204, %p205
      %p207 = scmp.ne.s32.totalorder %s196, %s197
      %p208 = scmp.eq.s32.totalorder %s30, 0
      %p209 = por %p207, %p208
      %p210 = scmp.ne.s32.totalorder %s196, %s197
      %p211 = scmp.eq.s32.totalorder %s31, 1
      %p212 = por %p210, %p211
      %p214 = scmp.ne.s32.totalorder %s197, %s213
      %p215 = scmp.eq.s32.totalorder %s31, 0
      %p216 = por %p214, %p215
      %s217 = sadd.s32 %s32, %s33
      %s218 = sadd.s32 %s51, %s47
      %s219 = ssub.s32 %s217, %s218
      %p220 = scmp.eq.s32.totalorder %s219, 0
      %s222 = sadd.s32 %s221, 1
      %s223 = scalar_select %p220, %s221, %s222
      %p226 = pneg %p220
      %p227 = scmp.eq.s32.totalorder %s25, 1
      %p228 = por %p226, %p227
      %p229 = scmp.ne.s32.totalorder %s221, %s224
      %p230 = scmp.eq.s32.totalorder %s25, 0
      %p231 = por %p229, %p230
      %p232 = scmp.ne.s32.totalorder %s221, %s224
      %p233 = scmp.eq.s32.totalorder %s30, 1
      %p234 = por %p232, %p233
      %p235 = scmp.ne.s32.totalorder %s224, %s225
      %p236 = scmp.eq.s32.totalorder %s30, 0
      %p237 = por %p235, %p236
      %p238 = scmp.ne.s32.totalorder %s224, %s225
      %p239 = scmp.eq.s32.totalorder %s31, 1
      %p240 = por %p238, %p239
      %p242 = scmp.ne.s32.totalorder %s225, %s241
      %p243 = scmp.eq.s32.totalorder %s31, 0
      %p244 = por %p242, %p243
      %p245 = scmp.le.s32.totalorder 1, %s25
      %p246 = scmp.lt.s32.totalorder %s25, 3
      %p247 = pnand %p245, %p246
      %p248 = pneg %p247
      // Predicated region
      $region9: #{tpu_custom_call.1} parent=5 // pred_check
        _
      $region10: #{tpu_custom_call.1} parent=5 // pred_check_branch
        %250 = sbr.rel (%p247) target = $region12
      $region11: #{tpu_custom_call.1} parent=5 // pred_region
        %s251 = ssub.s32 %s25, 1
        // Predicated region
        $region13: #{tpu_custom_call.1} parent=11 // pred_check
          %p252 = pneg %p65
        $region14: #{tpu_custom_call.1} parent=11 // pred_check_branch
          %254 = sbr.rel (%p252) target = $region16
        $region15: #{tpu_custom_call.1} parent=11 // pred_region
          %256 = vsyncadd [#allocation6], 0
          %s258 = sshll.u32 %s0, 4
          %s259 = int_to_ptr.hbm [resolvable:$true] %s258
          %261 = dma.hbm_to_smem %s259, 16, [#allocation3], [#allocation6]
        $region16: #{tpu_custom_call.1} parent=11 // pred_fallthru
          _
        // Predicated region
        $region17: #{tpu_custom_call.1} parent=11 // pred_check
          %p262 = pneg %p86
        $region18: #{tpu_custom_call.1} parent=11 // pred_check_branch
          %264 = sbr.rel (%p262) target = $region20
        $region19: #{tpu_custom_call.1} parent=11 // pred_region
          %266 = vsyncadd [#allocation8], 0
          %s268 = sshll.u32 %s1, 4
          %s269 = int_to_ptr.hbm [resolvable:$true] %s268
          %271 = dma.hbm_to_smem %s269, 16, [#allocation7], [#allocation8]
        $region20: #{tpu_custom_call.1} parent=11 // pred_fallthru
          _
        // Predicated region
        $region21: #{tpu_custom_call.1} parent=11 // pred_check
          %p272 = pneg %p107
        $region22: #{tpu_custom_call.1} parent=11 // pred_check_branch
          %274 = sbr.rel (%p272) target = $region24
        $region23: #{tpu_custom_call.1} parent=11 // pred_region
          %276 = vsyncadd [#allocation8], 0
          %s278 = sshll.u32 %s2, 4
          %s279 = int_to_ptr.hbm [resolvable:$true] %s278
          %281 = dma.hbm_to_smem %s279, 128, [#allocation9], [#allocation8]
        $region24: #{tpu_custom_call.1} parent=11 // pred_fallthru
          _
        // Predicated region
        $region25: #{tpu_custom_call.1} parent=11 // pred_check
          %p282 = pneg %p128
        $region26: #{tpu_custom_call.1} parent=11 // pred_check_branch
          %284 = sbr.rel (%p282) target = $region28
        $region27: #{tpu_custom_call.1} parent=11 // pred_region
          %286 = vsyncadd [#allocation11], 0
          %s288 = sshll.u32 %s3, 4
          %s289 = int_to_ptr.hbm [resolvable:$true] %s288
          %291 = dma.hbm_to_smem %s289, 128, [#allocation10], [#allocation11]
        $region28: #{tpu_custom_call.1} parent=11 // pred_fallthru
          _
        // Predicated region
        $region29: #{tpu_custom_call.1} parent=11 // pred_check
          %p292 = pneg %p149
        $region30: #{tpu_custom_call.1} parent=11 // pred_check_branch
          %294 = sbr.rel (%p292) target = $region32
        $region31: #{tpu_custom_call.1} parent=11 // pred_region
          %296 = vsyncadd [#allocation11], 0
          %s298 = sshll.u32 %s4, 4
          %s299 = int_to_ptr.hbm [resolvable:$true] %s298
          %301 = dma.hbm_to_smem %s299, 64, [#allocation12], [#allocation11]
        $region32: #{tpu_custom_call.1} parent=11 // pred_fallthru
          _
      $region12: #{tpu_custom_call.1} parent=5 // pred_fallthru
        _
      %p302 = scmp.lt.s32.totalorder %s25, 2
      // Predicated region
      $region33: #{tpu_custom_call.1} parent=5 // pred_check
        %p303 = pneg %p302
      $region34: #{tpu_custom_call.1} parent=5 // pred_check_branch
        %305 = sbr.rel (%p303) target = $region36
      $region35: #{tpu_custom_call.1} parent=5 // pred_region
        // Predicated region
        $region37: #{tpu_custom_call.1} parent=35 // pred_check
          %p306 = pneg %p173
        $region38: #{tpu_custom_call.1} parent=35 // pred_check_branch
          %308 = sbr.rel (%p306) target = $region40
        $region39: #{tpu_custom_call.1} parent=35 // pred_region
          %s309 = sand.u32 %s163, 1
          %s310 = scalar_lea.sflag [#allocation4], %s309
          %s311 = sand.u32 %s163, 1
          %s312 = smul.addr %s311, 4
          %s313 = scalar_lea.vmem [#allocation13], %s312
          %s314 = sadd.s32 %s33, %s34
          %316 = vsyncadd %s310, 0
          %s317 = smul.addr %s32, 4
          %s318 = sadd.s32 %s314, %s317
          %s319 = scalar_lea.hbm %s5, %s318
          %s320 = sshll.u32 %s319, 4
          %s321 = int_to_ptr.hbm [resolvable:$true] %s320
          %s322 = sshll.u32 %s313, 4
          %s323 = int_to_ptr.vmem [resolvable:$true] %s322
          %328 = dma.hbm_to_vmem [thread:$0]  %s321, 64, %s323, %s310, 16, 16, 1
        $region40: #{tpu_custom_call.1} parent=35 // pred_fallthru
          _
        // Predicated region
        $region41: #{tpu_custom_call.1} parent=35 // pred_check
          %p329 = pneg %p203
        $region42: #{tpu_custom_call.1} parent=35 // pred_check_branch
          %331 = sbr.rel (%p329) target = $region44
        $region43: #{tpu_custom_call.1} parent=35 // pred_region
          %s332 = sand.u32 %s193, 1
          %s333 = scalar_lea.sflag [#allocation15], %s332
          %s334 = sand.u32 %s193, 1
          %s335 = smul.addr %s334, 4
          %s336 = scalar_lea.vmem [#allocation14], %s335
          %s337 = sadd.s32 %s33, %s34
          %339 = vsyncadd %s333, 0
          %s340 = smul.addr %s32, 4
          %s341 = sadd.s32 %s337, %s340
          %s342 = scalar_lea.hbm %s6, %s341
          %s343 = sshll.u32 %s342, 4
          %s344 = int_to_ptr.hbm [resolvable:$true] %s343
          %s345 = sshll.u32 %s336, 4
          %s346 = int_to_ptr.vmem [resolvable:$true] %s345
          %351 = dma.hbm_to_vmem [thread:$0]  %s344, 64, %s346, %s333, 16, 16, 1
        $region44: #{tpu_custom_call.1} parent=35 // pred_fallthru
          _
      $region36: #{tpu_custom_call.1} parent=5 // pred_fallthru
        _
      %p352 = scmp.le.s32.totalorder 1, %s25
      %p353 = scmp.lt.s32.totalorder %s25, 3
      %p354 = pnand %p352, %p353
      %p355 = pneg %p354
      // Predicated region
      $region45: #{tpu_custom_call.1} parent=5 // pred_check
        _
      $region46: #{tpu_custom_call.1} parent=5 // pred_check_branch
        %357 = sbr.rel (%p354) target = $region48
      $region47: #{tpu_custom_call.1} parent=5 // pred_region
        %s358 = ssub.s32 %s25, 1
        // Predicated region
        $region49: #{tpu_custom_call.1} parent=47 // pred_check
          %p359 = pneg %p65
        $region50: #{tpu_custom_call.1} parent=47 // pred_check_branch
          %361 = sbr.rel (%p359) target = $region52
        $region51: #{tpu_custom_call.1} parent=47 // pred_region
          %363 = dma.done [#allocation6], 16
        $region52: #{tpu_custom_call.1} parent=47 // pred_fallthru
          _
        // Predicated region
        $region53: #{tpu_custom_call.1} parent=47 // pred_check
          %p364 = pneg %p86
        $region54: #{tpu_custom_call.1} parent=47 // pred_check_branch
          %366 = sbr.rel (%p364) target = $region56
        $region55: #{tpu_custom_call.1} parent=47 // pred_region
          %368 = dma.done [#allocation8], 16
        $region56: #{tpu_custom_call.1} parent=47 // pred_fallthru
          _
        // Predicated region
        $region57: #{tpu_custom_call.1} parent=47 // pred_check
          %p369 = pneg %p107
        $region58: #{tpu_custom_call.1} parent=47 // pred_check_branch
          %371 = sbr.rel (%p369) target = $region60
        $region59: #{tpu_custom_call.1} parent=47 // pred_region
          %373 = dma.done [#allocation8], 128
        $region60: #{tpu_custom_call.1} parent=47 // pred_fallthru
          _
        // Predicated region
        $region61: #{tpu_custom_call.1} parent=47 // pred_check
          %p374 = pneg %p128
        $region62: #{tpu_custom_call.1} parent=47 // pred_check_branch
          %376 = sbr.rel (%p374) target = $region64
        $region63: #{tpu_custom_call.1} parent=47 // pred_region
          %378 = dma.done [#allocation11], 128
        $region64: #{tpu_custom_call.1} parent=47 // pred_fallthru
          _
        // Predicated region
        $region65: #{tpu_custom_call.1} parent=47 // pred_check
          %p379 = pneg %p149
        $region66: #{tpu_custom_call.1} parent=47 // pred_check_branch
          %381 = sbr.rel (%p379) target = $region68
        $region67: #{tpu_custom_call.1} parent=47 // pred_region
          %383 = dma.done [#allocation11], 64
        $region68: #{tpu_custom_call.1} parent=47 // pred_fallthru
          _
        %s384 = sand.u32 %s166, 1
        %s385 = scalar_lea.sflag [#allocation4], %s384
        %s386 = sand.u32 %s166, 1
        %s387 = smul.addr %s386, 4
        %s388 = scalar_lea.vmem [#allocation13], %s387
        // Predicated region
        $region69: #{tpu_custom_call.1} parent=47 // pred_check
          %p389 = pneg %p179
        $region70: #{tpu_custom_call.1} parent=47 // pred_check_branch
          %391 = sbr.rel (%p389) target = $region72
        $region71: #{tpu_custom_call.1} parent=47 // pred_region
          %393 = dma.done %s385, 64
        $region72: #{tpu_custom_call.1} parent=47 // pred_fallthru
          _
        %s394 = sand.u32 %s196, 1
        %s395 = scalar_lea.sflag [#allocation15], %s394
        %s396 = sand.u32 %s196, 1
        %s397 = smul.addr %s396, 4
        %s398 = scalar_lea.vmem [#allocation14], %s397
        // Predicated region
        $region73: #{tpu_custom_call.1} parent=47 // pred_check
          %p399 = pneg %p209
        $region74: #{tpu_custom_call.1} parent=47 // pred_check_branch
          %401 = sbr.rel (%p399) target = $region76
        $region75: #{tpu_custom_call.1} parent=47 // pred_region
          %403 = dma.done %s395, 64
        $region76: #{tpu_custom_call.1} parent=47 // pred_fallthru
          _
        %404 = sfence
        %p405 = pneg %p65
        %p406 = pneg %p62
        %p407 = pneg %p86
        %p408 = pneg %p83
        %p409 = pneg %p107
        %p410 = pneg %p104
        %p411 = pneg %p128
        %p412 = pneg %p125
        %p413 = pneg %p149
        %p414 = pneg %p146
        %s415 = sand.u32 %s166, 1
        %s416 = scalar_lea.sflag [#allocation4], %s415
        %s417 = sand.u32 %s166, 1
        %s418 = smul.addr %s417, 4
        %s419 = scalar_lea.vmem [#allocation13], %s418
        %p420 = pneg %p179
        %p421 = pneg %p176
        %s422 = sand.u32 %s196, 1
        %s423 = scalar_lea.sflag [#allocation15], %s422
        %s424 = sand.u32 %s196, 1
        %s425 = smul.addr %s424, 4
        %s426 = scalar_lea.vmem [#allocation14], %s425
        %p427 = pneg %p209
        %p428 = pneg %p206
        %p429 = pneg %p237
        %p430 = pneg %p234
        %s431 = sand.u32 %s224, 1
        %s432 = scalar_lea.sflag [#allocation5], %s431
        %s433 = sand.u32 %s224, 1
        %s434 = scalar_lea.vmem [#allocation16], %s433
        %s435 = sadd.s32 %s36, %s37
        %s436 = sadd.s32 %s36, %s37
        %s437 = sadd.s32 %s35, %s36
        %s438 = sld [smem:[#allocation3 + %s35]]
        %s439 = sld [smem:[#allocation9 + %s438]]
        %s440 = sld [smem:[#allocation10 + %s438]]
        %s441 = sld [smem:[#allocation7 + %s35]]
        %s442 = sld [smem:[#allocation12]]
        %s443 = sld [smem:[#allocation12 + $0x1]]
        %s444 = sld [smem:[#allocation12 + $0x2]]
        %s445 = sld [smem:[#allocation12 + $0x3]]
        %s446 = sld [smem:[#allocation12 + $0x80]]
        %s447 = sld [smem:[#allocation12 + $0x81]]
        %s448 = sld [smem:[#allocation12 + $0x82]]
        %s449 = sld [smem:[#allocation12 + $0x83]]
        %s450 = sld [smem:[#allocation12 + $0x100]]
        %s451 = sld [smem:[#allocation12 + $0x101]]
        %s452 = sld [smem:[#allocation12 + $0x102]]
        %s453 = sld [smem:[#allocation12 + $0x103]]
        %s454 = sld [smem:[#allocation12 + $0x180]]
        %s455 = sld [smem:[#allocation12 + $0x181]]
        %s456 = sld [smem:[#allocation12 + $0x182]]
        %s457 = sld [smem:[#allocation12 + $0x183]]
        %p458 = scmp.eq.s32.totalorder %s37, 0
        // Predicated region
        $region77: #{tpu_custom_call.1} parent=47 // pred_check
          %p459 = pneg %p458
        $region78: #{tpu_custom_call.1} parent=47 // pred_check_branch
          %461 = sbr.rel (%p459) target = $region80
        $region79: #{tpu_custom_call.1} parent=47 // pred_region
          %462 = vst [vmem:[#allocation2] sm:$0x3] 0.0
        $region80: #{tpu_custom_call.1} parent=47 // pred_fallthru
          _
        %v463 = vld [vmem:[%s388] sm:$0x1]
        %v464 = vunpack.c.l.bf16 %v463
        %s465 = scalar_lea.vmem %s388, 1 [#allocation13]
        %v466 = vld [vmem:[%s465] sm:$0x1]
        %v467 = vunpack.c.l.bf16 %v466
        %s468 = scalar_lea.vmem %s388, 2 [#allocation13]
        %v469 = vld [vmem:[%s468] sm:$0x1]
        %v470 = vunpack.c.l.bf16 %v469
        %s471 = scalar_lea.vmem %s388, 3 [#allocation13]
        %v472 = vld [vmem:[%s471] sm:$0x1]
        %v473 = vunpack.c.l.bf16 %v472
        %v474 = vld [vmem:[%s398] sm:$0x1]
        %v475 = vunpack.c.l.bf16 %v474
        %s476 = scalar_lea.vmem %s398, 1 [#allocation14]
        %v477 = vld [vmem:[%s476] sm:$0x1]
        %v478 = vunpack.c.l.bf16 %v477
        %s479 = scalar_lea.vmem %s398, 2 [#allocation14]
        %v480 = vld [vmem:[%s479] sm:$0x1]
        %v481 = vunpack.c.l.bf16 %v480
        %s482 = scalar_lea.vmem %s398, 3 [#allocation14]
        %v483 = vld [vmem:[%s482] sm:$0x1]
        %v484 = vunpack.c.l.bf16 %v483
        %v485 = vstv %s439
        %v486 = vmul.f32 %v485, %v464
        %v487 = vstv %s440
        %v488 = vmul.f32 %v487, %v475
        %v489 = vadd.f32 %v486, %v488
        %v490 = vmul.f32 %v485, %v467
        %v491 = vmul.f32 %v487, %v478
        %v492 = vadd.f32 %v490, %v491
        %v493 = vmul.f32 %v485, %v470
        %v494 = vmul.f32 %v487, %v481
        %v495 = vadd.f32 %v493, %v494
        %v496 = vmul.f32 %v485, %v473
        %v497 = vmul.f32 %v487, %v484
        %v498 = vadd.f32 %v496, %v497
        %v499 = vstv %s442
        %v500 = vmul.f32 %v489, %v499
        %v501 = vstv %s446
        %v502 = vmul.f32 %v492, %v501
        %v503 = vadd.f32 %v500, %v502
        %v504 = vstv %s450
        %v505 = vmul.f32 %v495, %v504
        %v506 = vadd.f32 %v503, %v505
        %v507 = vstv %s454
        %v508 = vmul.f32 %v498, %v507
        %v509 = vadd.f32 %v506, %v508
        %v510 = vstv %s441
        %v511 = vadd.f32 %v509, %v510
        %v512 = vtanh.pop %v511
        %v513 = vsub.f32 %v512, %v475
        %v514 = vmul.f32 %v513, %v513
        %v515 = vstv %s443
        %v516 = vmul.f32 %v489, %v515
        %v517 = vstv %s447
        %v518 = vmul.f32 %v492, %v517
        %v519 = vadd.f32 %v516, %v518
        %v520 = vstv %s451
        %v521 = vmul.f32 %v495, %v520
        %v522 = vadd.f32 %v519, %v521
        %v523 = vstv %s455
        %v524 = vmul.f32 %v498, %v523
        %v525 = vadd.f32 %v522, %v524
        %v526 = vadd.f32 %v525, %v510
        %v527 = vtanh.pop %v526
        %v528 = vsub.f32 %v527, %v478
        %v529 = vmul.f32 %v528, %v528
        %v530 = vadd.f32 %v514, %v529
        %v531 = vstv %s444
        %v532 = vmul.f32 %v489, %v531
        %v533 = vstv %s448
        %v534 = vmul.f32 %v492, %v533
        %v535 = vadd.f32 %v532, %v534
        %v536 = vstv %s452
        %v537 = vmul.f32 %v495, %v536
        %v538 = vadd.f32 %v535, %v537
        %v539 = vstv %s456
        %v540 = vmul.f32 %v498, %v539
        %v541 = vadd.f32 %v538, %v540
        %v542 = vadd.f32 %v541, %v510
        %v543 = vtanh.pop %v542
        %v544 = vsub.f32 %v543, %v481
        %v545 = vmul.f32 %v544, %v544
        %v546 = vadd.f32 %v530, %v545
        %v547 = vstv %s445
        %v548 = vmul.f32 %v489, %v547
        %v549 = vstv %s449
        %v550 = vmul.f32 %v492, %v549
        %v551 = vadd.f32 %v548, %v550
        %v552 = vstv %s453
        %v553 = vmul.f32 %v495, %v552
        %v554 = vadd.f32 %v551, %v553
        %v555 = vstv %s457
        %v556 = vmul.f32 %v498, %v555
        %v557 = vadd.f32 %v554, %v556
        %v558 = vadd.f32 %v557, %v510
        %v559 = vtanh.pop %v558
        %v560 = vsub.f32 %v559, %v484
        %v561 = vmul.f32 %v560, %v560
        %v562 = vadd.f32 %v546, %v561
        %v563 = vld [vmem:[#allocation2] sm:$0x3]
        %v564 = vadd.f32 %v563, %v562
        %565 = vst [vmem:[#allocation2] sm:$0x3] %v564
        // Predicated region
        $region81: #{tpu_custom_call.1} parent=47 // pred_check
          %p566 = pneg %p458
        $region82: #{tpu_custom_call.1} parent=47 // pred_check_branch
          %568 = sbr.rel (%p566) target = $region84
        $region83: #{tpu_custom_call.1} parent=47 // pred_region
          %v569 = vld [vmem:[#allocation2] sm:$0x3]
          %vm570 = vcmask 1041408
          %v571 = vsel %vm570, %v569, 0.0
          %v572 = vrot.slane %v571, 4
          %v573 = vadd.f32 %v571, %v572
          %v574 = vrot.slane %v573, 2
          %v575 = vadd.f32 %v573, %v574
          %v576 = vrot.slane %v575, 1
          %v577 = vadd.f32 %v575, %v576
          %578 = vst [vmem:[%s434] sm:$0x1] %v577
        $region84: #{tpu_custom_call.1} parent=47 // pred_fallthru
          _
        %s579 = sand.u32 %s224, 1
        %s580 = scalar_lea.sflag [#allocation5], %s579
        %s581 = sand.u32 %s224, 1
        %s582 = scalar_lea.vmem [#allocation16], %s581
        // Predicated region
        $region85: #{tpu_custom_call.1} parent=47 // pred_check
          %p583 = pneg %p234
        $region86: #{tpu_custom_call.1} parent=47 // pred_check_branch
          %585 = sbr.rel (%p583) target = $region88
        $region87: #{tpu_custom_call.1} parent=47 // pred_region
          %s586 = sadd.s32 %s35, %s36
          %588 = vsyncadd %s580, 0
          %s589 = scalar_lea.hbm %s7, %s586
          %s591 = sshll.u32 %s582, 4
          %s592 = int_to_ptr.vmem [resolvable:$true] %s591
          %s593 = sshll.u32 %s589, 4
          %s594 = int_to_ptr.hbm [resolvable:$true] %s593
          %596 = dma.vmem_to_hbm [thread:$0]  %s592, 16, %s594, %s580
        $region88: #{tpu_custom_call.1} parent=47 // pred_fallthru
          _
      $region48: #{tpu_custom_call.1} parent=5 // pred_fallthru
        _
      %p597 = scmp.le.s32.totalorder 2, %s25
      // Predicated region
      $region89: #{tpu_custom_call.1} parent=5 // pred_check
        %p598 = pneg %p597
      $region90: #{tpu_custom_call.1} parent=5 // pred_check_branch
        %600 = sbr.rel (%p598) target = $region92
      $region91: #{tpu_custom_call.1} parent=5 // pred_region
        %s601 = ssub.s32 %s25, 2
        // Predicated region
        $region93: #{tpu_custom_call.1} parent=91 // pred_check
          %p602 = pneg %p240
        $region94: #{tpu_custom_call.1} parent=91 // pred_check_branch
          %604 = sbr.rel (%p602) target = $region96
        $region95: #{tpu_custom_call.1} parent=91 // pred_region
          %s605 = sand.u32 %s225, 1
          %s606 = scalar_lea.sflag [#allocation5], %s605
          %s607 = sand.u32 %s225, 1
          %s608 = scalar_lea.vmem [#allocation16], %s607
          %610 = dma.done %s606, 16
        $region96: #{tpu_custom_call.1} parent=91 // pred_fallthru
          _
      $region92: #{tpu_custom_call.1} parent=5 // pred_fallthru
        _
    $region6: #{tpu_custom_call.1} parent=1 // loop_footer
      %s29 = sadd.s32 1, %s25
    $region7: #{tpu_custom_call.1} parent=1 // loop_footer_branch
      %24 = sbr.rel target = $region3
    $region8: #{tpu_custom_call.1} parent=1 // loop_exit
      _
    %611 = vsyncpa [#allocation4], 1
    %s612 = scalar_lea.sflag [#allocation4], 1
    %613 = vsyncpa %s612, 1
    %614 = vsyncpa [#allocation15], 1
    %s615 = scalar_lea.sflag [#allocation15], 1
    %616 = vsyncpa %s615, 1
    %617 = vsyncpa [#allocation5], 1
    %s618 = scalar_lea.sflag [#allocation5], 1
    %619 = vsyncpa %s618, 1
    %620 = vsyncpa [#allocation6], 1
    %s621 = scalar_lea.sflag [#allocation6], 1
    %622 = vsyncpa %s621, 1
    %623 = vsyncpa [#allocation8], 1
    %624 = vsyncpa [#allocation11], 1

</llo_original>
